<compile_context>
chip_gen: v5e
topology: v5e:2x2
jax: 0.10.0
libtpu: 0.0.40
codegen_flags: <defaults>
</compile_context>

<pallas_src>
import jax
import jax.numpy as jnp
from jax.experimental import pallas as pl
from jax.experimental.pallas import tpu as pltpu


def _biaffine_kernel(x1_ref, x2_ref, wm_ref, wr_ref, wc_ref, ws_ref, o_ref):
    # x1_ref: (1, TL1, D1)   x2_ref: (1, TL2, D2)
    # wm_ref: (O, D2, D1)    wr_ref: (O, D2)   wc_ref: (O, D1)   ws_ref: (1, O)
    # o_ref : (1, O, TL1, TL2)
    x1 = x1_ref[0]                      # (TL1, D1)
    x2 = x2_ref[0]                      # (TL2, D2)
    wr = wr_ref[...]                    # (O, D2)
    num_out = wm_ref.shape[0]

    # Contract the last dim of both operands (A @ B^T, MXU-native; no .T).
    contract_last = (((1,), (1,)), ((), ()))

    # Shared over o: x1-features x x2-bias (+ bias*bias) column term. (TL1, O)
    colbias = jax.lax.dot_general(
        x1, wc_ref[...], contract_last,
        preferred_element_type=jnp.float32) + ws_ref[...].astype(jnp.float32)

    for o in range(num_out):            # static unroll; O is small
        # (TL1, D1) x (D2, D1) -> (TL1, D2) on the MXU.
        affine = jax.lax.dot_general(
            x1, wm_ref[o], contract_last, preferred_element_type=jnp.float32)
        # Fold the x1-bias column of W: broadcast row add (no relayout).
        affine = (affine + wr[o:o + 1, :]).astype(x2.dtype)
        # (TL1, D2) x (TL2, D2) -> (TL1, TL2) on the MXU.
        out_o = jax.lax.dot_general(
            affine, x2, contract_last, preferred_element_type=jnp.float32)
        # Fold the x2-bias column: broadcast column add.
        out_o = out_o + colbias[:, o:o + 1]
        o_ref[0, o] = out_o.astype(o_ref.dtype)


def biaffine_forward(input1, input2, W, out_features, bias=(True, True),
                     *, compute_dtype=None):
    """input1: (B, L1, D1), input2: (B, L2, D2), W: (O*(D2+bias1), D1+bias0).

    compute_dtype: optionally cast MXU operands (e.g. jnp.bfloat16 on
    v6e/v7x); accumulation stays float32.
    """
    B, L1, D1 = input1.shape
    _, L2, D2 = input2.shape
    O = out_features
    D1b = D1 + int(bias[0])
    D2b = D2 + int(bias[1])
    assert W.shape == (O * D2b, D1b), (W.shape, (O * D2b, D1b))

    # Host-side weight prep (tiny, one-time): split out the bias rows/cols so
    # the kernel never needs augmented inputs or an in-kernel reshape.
    W3 = W.reshape(O, D2b, D1b)
    Wm = W3[:, :D2, :D1]                                    # (O, D2, D1)
    wr = (W3[:, :D2, D1] if bias[0]
          else jnp.zeros((O, D2), W.dtype))                 # (O, D2)
    wc = (W3[:, D2, :D1] if bias[1]
          else jnp.zeros((O, D1), W.dtype))                 # (O, D1)
    ws = (W3[:, D2, D1].reshape(1, O) if (bias[0] and bias[1])
          else jnp.zeros((1, O), W.dtype))                  # (1, O)

    if compute_dtype is not None:
        input1 = input1.astype(compute_dtype)
        input2 = input2.astype(compute_dtype)
        Wm = Wm.astype(compute_dtype)
        wr = wr.astype(compute_dtype)
        wc = wc.astype(compute_dtype)
        ws = ws.astype(compute_dtype)

    # Sequence tiling keeps the per-step VMEM working set bounded at
    # production lengths (double-buffered); toy sizes collapse to one tile.
    TL1 = min(L1, 256)
    TL2 = min(L2, 512)
    n_l1 = pl.cdiv(L1, TL1)
    n_l2 = pl.cdiv(L2, TL2)

    # Explicit scoped-VMEM limit (conservative for v7x's 64 MiB physical VMEM).
    in_item = jnp.dtype(input1.dtype).itemsize
    est = (2 * in_item * (TL1 * D1 + TL2 * D2 + O * D2 * D1 + O * D2 + O * D1 + O)
           + 2 * 4 * (O * TL1 * TL2))
    vmem_limit = int(min(max(3 * est, 16 * 1024 * 1024), 48 * 1024 * 1024))

    out = pl.pallas_call(
        _biaffine_kernel,
        out_shape=jax.ShapeDtypeStruct((B, O, L1, L2), jnp.float32),
        grid_spec=pltpu.PrefetchScalarGridSpec(
            num_scalar_prefetch=0,
            grid=(B, n_l1, n_l2),
            in_specs=[
                pl.BlockSpec((1, TL1, D1), lambda b, i, j: (b, i, 0)),
                pl.BlockSpec((1, TL2, D2), lambda b, i, j: (b, j, 0)),
                pl.BlockSpec((O, D2, D1), lambda b, i, j: (0, 0, 0)),
                pl.BlockSpec((O, D2), lambda b, i, j: (0, 0)),
                pl.BlockSpec((O, D1), lambda b, i, j: (0, 0)),
                pl.BlockSpec((1, O), lambda b, i, j: (0, 0)),
            ],
            out_specs=pl.BlockSpec((1, O, TL1, TL2),
                                   lambda b, i, j: (b, 0, i, j)),
        ),
        compiler_params=pltpu.CompilerParams(
            dimension_semantics=("parallel", "parallel", "parallel"),
            vmem_limit_bytes=vmem_limit),
    )(input1, input2, Wm, wr, wc, ws)

    # Kernel emits lane-dense (B, O, L1, L2); match module layout (B, L1, L2, O).
    # TODO(synk): fuse this transpose into the consumer if the downstream op
    # can take (B, O, L1, L2) directly (avoids one extra HBM pass).
    return jnp.transpose(out, (0, 2, 3, 1))


def _reference(input1, input2, W, out_features, bias=(True, True)):
    B, L1, _ = input1.shape
    _, L2, _ = input2.shape
    O = out_features
    if bias[0]:
        input1 = jnp.concatenate(
            [input1, jnp.ones((B, L1, 1), input1.dtype)], axis=2)
    if bias[1]:
        input2 = jnp.concatenate(
            [input2, jnp.ones((B, L2, 1), input2.dtype)], axis=2)
    D2b = input2.shape[2]
    affine = jnp.einsum('bld,od->blo', input1, W)              # (B, L1, O*D2b)
    affine = affine.reshape(B, L1 * O, D2b)
    bi = jnp.einsum('bkd,bjd->bkj', affine, input2)            # (B, L1*O, L2)
    return jnp.transpose(bi.reshape(B, L1, O, L2), (0, 1, 3, 2))


if __name__ == "__main__":
    # Small shapes consistent with Biaffine(in1=32, in2=32, out=4)
    B, L1, L2 = 2, 8, 8
    in1_features, in2_features, out_features = 32, 32, 4
    bias = (True, True)

    key = jax.random.PRNGKey(0)
    k1, k2, kw = jax.random.split(key, 3)
    input1 = jax.random.normal(k1, (B, L1, in1_features), dtype=jnp.float32)
    input2 = jax.random.normal(k2, (B, L2, in2_features), dtype=jnp.float32)

    linear_input_size = in1_features + int(bias[0])
    linear_output_size = out_features * (in2_features + int(bias[1]))
    # Deterministic non-zero weight (module's __init__ zero-fills; see NOTE).
    W = jax.random.normal(
        kw, (linear_output_size, linear_input_size), dtype=jnp.float32) * 0.1

    out = biaffine_forward(input1, input2, W, out_features, bias)
    out = jax.block_until_ready(out)

    ref = _reference(input1, input2, W, out_features, bias)
    assert out.shape == (B, L1, L2, out_features), out.shape
    max_err = float(jnp.max(jnp.abs(out - ref)))
    assert jnp.allclose(out, ref, atol=1e-4, rtol=1e-4), max_err
    print("KERNEL_OK")
</pallas_src>

<mosaic_0001>
module attributes {stable_mosaic.version = 11 : i64} {
  func.func @_biaffine_kernel(%arg0: i32, %arg1: i32, %arg2: i32, %arg3: memref<1x8x32xf32, #tpu.memory_space<vmem>>, %arg4: memref<1x8x32xf32, #tpu.memory_space<vmem>>, %arg5: memref<4x32x32xf32, #tpu.memory_space<vmem>>, %arg6: memref<4x32xf32, #tpu.memory_space<vmem>>, %arg7: memref<4x32xf32, #tpu.memory_space<vmem>>, %arg8: memref<1x4xf32, #tpu.memory_space<vmem>>, %arg9: memref<1x4x8x8xf32, #tpu.memory_space<vmem>>) attributes {dimension_semantics = [#tpu.dimension_semantics<parallel>, #tpu.dimension_semantics<parallel>, #tpu.dimension_semantics<parallel>], iteration_bounds = array<i64: 2, 1, 1>, scalar_prefetch = 0 : i64, scratch_operands = 0 : i64, tpu.core_type = #tpu.core_type<tc>, window_params = [{transform_indices = @transform_0, window_bounds = array<i64: 1, 8, 32>}, {transform_indices = @transform_1, window_bounds = array<i64: 1, 8, 32>}, {pipeline_mode = #tpu.pipeline_mode<synchronous>, transform_indices = @transform_2, window_bounds = array<i64: 4, 32, 32>}, {pipeline_mode = #tpu.pipeline_mode<synchronous>, transform_indices = @transform_3, window_bounds = array<i64: 4, 32>}, {pipeline_mode = #tpu.pipeline_mode<synchronous>, transform_indices = @transform_4, window_bounds = array<i64: 4, 32>}, {pipeline_mode = #tpu.pipeline_mode<synchronous>, transform_indices = @transform_5, window_bounds = array<i64: 1, 4>}, {transform_indices = @transform_6, window_bounds = array<i64: 1, 4, 8, 8>}]} {
    %c0 = arith.constant 0 : index
    %c0_0 = arith.constant 0 : index
    %c0_1 = arith.constant 0 : index
    %0 = vector.load %arg3[%c0, %c0_0, %c0_1] : memref<1x8x32xf32, #tpu.memory_space<vmem>>, vector<1x8x32xf32>
    %1 = vector.shape_cast %0 : vector<1x8x32xf32> to vector<8x32xf32>
    %c0_2 = arith.constant 0 : index
    %c0_3 = arith.constant 0 : index
    %c0_4 = arith.constant 0 : index
    %2 = vector.load %arg4[%c0_2, %c0_3, %c0_4] : memref<1x8x32xf32, #tpu.memory_space<vmem>>, vector<1x8x32xf32>
    %3 = vector.shape_cast %2 : vector<1x8x32xf32> to vector<8x32xf32>
    %c0_5 = arith.constant 0 : index
    %c0_6 = arith.constant 0 : index
    %4 = vector.load %arg6[%c0_5, %c0_6] : memref<4x32xf32, #tpu.memory_space<vmem>>, vector<4x32xf32>
    %c0_7 = arith.constant 0 : index
    %c0_8 = arith.constant 0 : index
    %5 = vector.load %arg7[%c0_7, %c0_8] : memref<4x32xf32, #tpu.memory_space<vmem>>, vector<4x32xf32>
    %cst = arith.constant dense<0.000000e+00> : vector<8x4xf32>
    %6 = tpu.matmul %1, %5, %cst {dimension_numbers = #tpu.dot_dimension_numbers<[1], [1], [0], [0], [0, 0, 1, 0], [], []>} : vector<8x32xf32>, vector<4x32xf32>, vector<8x4xf32> -> vector<8x4xf32>
    %c0_9 = arith.constant 0 : index
    %c0_10 = arith.constant 0 : index
    %7 = vector.load %arg8[%c0_9, %c0_10] : memref<1x4xf32, #tpu.memory_space<vmem>>, vector<1x4xf32>
    %8 = vector.broadcast %7 : vector<1x4xf32> to vector<8x4xf32>
    %9 = arith.addf %6, %8 : vector<8x4xf32>
    %c0_11 = arith.constant 0 : index
    %c0_12 = arith.constant 0 : index
    %c0_13 = arith.constant 0 : index
    %10 = vector.load %arg5[%c0_11, %c0_12, %c0_13] : memref<4x32x32xf32, #tpu.memory_space<vmem>>, vector<1x32x32xf32>
    %11 = vector.shape_cast %10 : vector<1x32x32xf32> to vector<32x32xf32>
    %cst_14 = arith.constant dense<0.000000e+00> : vector<8x32xf32>
    %12 = tpu.matmul %1, %11, %cst_14 {dimension_numbers = #tpu.dot_dimension_numbers<[1], [1], [0], [0], [0, 0, 1, 0], [], []>} : vector<8x32xf32>, vector<32x32xf32>, vector<8x32xf32> -> vector<8x32xf32>
    %13 = vector.extract_strided_slice %4 {offsets = [0, 0], sizes = [1, 32], strides = [1, 1]} : vector<4x32xf32> to vector<1x32xf32>
    %14 = vector.broadcast %13 : vector<1x32xf32> to vector<8x32xf32>
    %15 = arith.addf %12, %14 : vector<8x32xf32>
    %cst_15 = arith.constant dense<0.000000e+00> : vector<8x8xf32>
    %16 = tpu.matmul %15, %3, %cst_15 {dimension_numbers = #tpu.dot_dimension_numbers<[1], [1], [0], [0], [0, 0, 1, 0], [], []>} : vector<8x32xf32>, vector<8x32xf32>, vector<8x8xf32> -> vector<8x8xf32>
    %17 = vector.extract_strided_slice %9 {offsets = [0, 0], sizes = [8, 1], strides = [1, 1]} : vector<8x4xf32> to vector<8x1xf32>
    %18 = vector.broadcast %17 : vector<8x1xf32> to vector<8x8xf32>
    %19 = arith.addf %16, %18 : vector<8x8xf32>
    %c0_16 = arith.constant 0 : index
    %c0_17 = arith.constant 0 : index
    %c0_18 = arith.constant 0 : index
    %c0_19 = arith.constant 0 : index
    %20 = vector.load %arg9[%c0_16, %c0_17, %c0_18, %c0_19] : memref<1x4x8x8xf32, #tpu.memory_space<vmem>>, vector<1x1x8x8xf32>
    %21 = vector.shape_cast %20 : vector<1x1x8x8xf32> to vector<8x8xf32>
    %22 = vector.shape_cast %19 : vector<8x8xf32> to vector<1x1x8x8xf32>
    tpu.vector_store %arg9[%c0_16, %c0_17, %c0_18, %c0_19], %22 {strides = array<i32>} : memref<1x4x8x8xf32, #tpu.memory_space<vmem>>, vector<1x1x8x8xf32>,
    %c1 = arith.constant 1 : index
    %c0_20 = arith.constant 0 : index
    %c0_21 = arith.constant 0 : index
    %23 = vector.load %arg5[%c1, %c0_20, %c0_21] : memref<4x32x32xf32, #tpu.memory_space<vmem>>, vector<1x32x32xf32>
    %24 = vector.shape_cast %23 : vector<1x32x32xf32> to vector<32x32xf32>
    %cst_22 = arith.constant dense<0.000000e+00> : vector<8x32xf32>
    %25 = tpu.matmul %1, %24, %cst_22 {dimension_numbers = #tpu.dot_dimension_numbers<[1], [1], [0], [0], [0, 0, 1, 0], [], []>} : vector<8x32xf32>, vector<32x32xf32>, vector<8x32xf32> -> vector<8x32xf32>
    %26 = vector.extract_strided_slice %4 {offsets = [1, 0], sizes = [1, 32], strides = [1, 1]} : vector<4x32xf32> to vector<1x32xf32>
    %27 = vector.broadcast %26 : vector<1x32xf32> to vector<8x32xf32>
    %28 = arith.addf %25, %27 : vector<8x32xf32>
    %cst_23 = arith.constant dense<0.000000e+00> : vector<8x8xf32>
    %29 = tpu.matmul %28, %3, %cst_23 {dimension_numbers = #tpu.dot_dimension_numbers<[1], [1], [0], [0], [0, 0, 1, 0], [], []>} : vector<8x32xf32>, vector<8x32xf32>, vector<8x8xf32> -> vector<8x8xf32>
    %30 = vector.extract_strided_slice %9 {offsets = [0, 1], sizes = [8, 1], strides = [1, 1]} : vector<8x4xf32> to vector<8x1xf32>
    %31 = vector.broadcast %30 : vector<8x1xf32> to vector<8x8xf32>
    %32 = arith.addf %29, %31 : vector<8x8xf32>
    %c0_24 = arith.constant 0 : index
    %c1_25 = arith.constant 1 : index
    %c0_26 = arith.constant 0 : index
    %c0_27 = arith.constant 0 : index
    %33 = vector.load %arg9[%c0_24, %c1_25, %c0_26, %c0_27] : memref<1x4x8x8xf32, #tpu.memory_space<vmem>>, vector<1x1x8x8xf32>
    %34 = vector.shape_cast %33 : vector<1x1x8x8xf32> to vector<8x8xf32>
    %35 = vector.shape_cast %32 : vector<8x8xf32> to vector<1x1x8x8xf32>
    tpu.vector_store %arg9[%c0_24, %c1_25, %c0_26, %c0_27], %35 {strides = array<i32>} : memref<1x4x8x8xf32, #tpu.memory_space<vmem>>, vector<1x1x8x8xf32>,
    %c2 = arith.constant 2 : index
    %c0_28 = arith.constant 0 : index
    %c0_29 = arith.constant 0 : index
    %36 = vector.load %arg5[%c2, %c0_28, %c0_29] : memref<4x32x32xf32, #tpu.memory_space<vmem>>, vector<1x32x32xf32>
    %37 = vector.shape_cast %36 : vector<1x32x32xf32> to vector<32x32xf32>
    %cst_30 = arith.constant dense<0.000000e+00> : vector<8x32xf32>
    %38 = tpu.matmul %1, %37, %cst_30 {dimension_numbers = #tpu.dot_dimension_numbers<[1], [1], [0], [0], [0, 0, 1, 0], [], []>} : vector<8x32xf32>, vector<32x32xf32>, vector<8x32xf32> -> vector<8x32xf32>
    %39 = vector.extract_strided_slice %4 {offsets = [2, 0], sizes = [1, 32], strides = [1, 1]} : vector<4x32xf32> to vector<1x32xf32>
    %40 = vector.broadcast %39 : vector<1x32xf32> to vector<8x32xf32>
    %41 = arith.addf %38, %40 : vector<8x32xf32>
    %cst_31 = arith.constant dense<0.000000e+00> : vector<8x8xf32>
    %42 = tpu.matmul %41, %3, %cst_31 {dimension_numbers = #tpu.dot_dimension_numbers<[1], [1], [0], [0], [0, 0, 1, 0], [], []>} : vector<8x32xf32>, vector<8x32xf32>, vector<8x8xf32> -> vector<8x8xf32>
    %43 = vector.extract_strided_slice %9 {offsets = [0, 2], sizes = [8, 1], strides = [1, 1]} : vector<8x4xf32> to vector<8x1xf32>
    %44 = vector.broadcast %43 : vector<8x1xf32> to vector<8x8xf32>
    %45 = arith.addf %42, %44 : vector<8x8xf32>
    %c0_32 = arith.constant 0 : index
    %c2_33 = arith.constant 2 : index
    %c0_34 = arith.constant 0 : index
    %c0_35 = arith.constant 0 : index
    %46 = vector.load %arg9[%c0_32, %c2_33, %c0_34, %c0_35] : memref<1x4x8x8xf32, #tpu.memory_space<vmem>>, vector<1x1x8x8xf32>
    %47 = vector.shape_cast %46 : vector<1x1x8x8xf32> to vector<8x8xf32>
    %48 = vector.shape_cast %45 : vector<8x8xf32> to vector<1x1x8x8xf32>
    tpu.vector_store %arg9[%c0_32, %c2_33, %c0_34, %c0_35], %48 {strides = array<i32>} : memref<1x4x8x8xf32, #tpu.memory_space<vmem>>, vector<1x1x8x8xf32>,
    %c3 = arith.constant 3 : index
    %c0_36 = arith.constant 0 : index
    %c0_37 = arith.constant 0 : index
    %49 = vector.load %arg5[%c3, %c0_36, %c0_37] : memref<4x32x32xf32, #tpu.memory_space<vmem>>, vector<1x32x32xf32>
    %50 = vector.shape_cast %49 : vector<1x32x32xf32> to vector<32x32xf32>
    %cst_38 = arith.constant dense<0.000000e+00> : vector<8x32xf32>
    %51 = tpu.matmul %1, %50, %cst_38 {dimension_numbers = #tpu.dot_dimension_numbers<[1], [1], [0], [0], [0, 0, 1, 0], [], []>} : vector<8x32xf32>, vector<32x32xf32>, vector<8x32xf32> -> vector<8x32xf32>
    %52 = vector.extract_strided_slice %4 {offsets = [3, 0], sizes = [1, 32], strides = [1, 1]} : vector<4x32xf32> to vector<1x32xf32>
    %53 = vector.broadcast %52 : vector<1x32xf32> to vector<8x32xf32>
    %54 = arith.addf %51, %53 : vector<8x32xf32>
    %cst_39 = arith.constant dense<0.000000e+00> : vector<8x8xf32>
    %55 = tpu.matmul %54, %3, %cst_39 {dimension_numbers = #tpu.dot_dimension_numbers<[1], [1], [0], [0], [0, 0, 1, 0], [], []>} : vector<8x32xf32>, vector<8x32xf32>, vector<8x8xf32> -> vector<8x8xf32>
    %56 = vector.extract_strided_slice %9 {offsets = [0, 3], sizes = [8, 1], strides = [1, 1]} : vector<8x4xf32> to vector<8x1xf32>
    %57 = vector.broadcast %56 : vector<8x1xf32> to vector<8x8xf32>
    %58 = arith.addf %55, %57 : vector<8x8xf32>
    %c0_40 = arith.constant 0 : index
    %c3_41 = arith.constant 3 : index
    %c0_42 = arith.constant 0 : index
    %c0_43 = arith.constant 0 : index
    %59 = vector.load %arg9[%c0_40, %c3_41, %c0_42, %c0_43] : memref<1x4x8x8xf32, #tpu.memory_space<vmem>>, vector<1x1x8x8xf32>
    %60 = vector.shape_cast %59 : vector<1x1x8x8xf32> to vector<8x8xf32>
    %61 = vector.shape_cast %58 : vector<8x8xf32> to vector<1x1x8x8xf32>
    tpu.vector_store %arg9[%c0_40, %c3_41, %c0_42, %c0_43], %61 {strides = array<i32>} : memref<1x4x8x8xf32, #tpu.memory_space<vmem>>, vector<1x1x8x8xf32>,
    return
  }
  func.func @transform_0(%arg0: i32, %arg1: i32, %arg2: i32) -> (i32, i32, i32) {
    %c0_i32 = arith.constant 0 : i32
    %c0_i32_0 = arith.constant 0 : i32
    return %arg0, %arg1, %c0_i32 : i32, i32, i32
  }
  func.func @transform_1(%arg0: i32, %arg1: i32, %arg2: i32) -> (i32, i32, i32) {
    %c0_i32 = arith.constant 0 : i32
    %c0_i32_0 = arith.constant 0 : i32
    return %arg0, %arg2, %c0_i32 : i32, i32, i32
  }
  func.func @transform_2(%arg0: i32, %arg1: i32, %arg2: i32) -> (i32, i32, i32) {
    %c0_i32 = arith.constant 0 : i32
    %c0_i32_0 = arith.constant 0 : i32
    %c0_i32_1 = arith.constant 0 : i32
    %c0_i32_2 = arith.constant 0 : i32
    return %c0_i32, %c0_i32_0, %c0_i32_1 : i32, i32, i32
  }
  func.func @transform_3(%arg0: i32, %arg1: i32, %arg2: i32) -> (i32, i32) {
    %c0_i32 = arith.constant 0 : i32
    %c0_i32_0 = arith.constant 0 : i32
    %c0_i32_1 = arith.constant 0 : i32
    return %c0_i32, %c0_i32_0 : i32, i32
  }
  func.func @transform_4(%arg0: i32, %arg1: i32, %arg2: i32) -> (i32, i32) {
    %c0_i32 = arith.constant 0 : i32
    %c0_i32_0 = arith.constant 0 : i32
    %c0_i32_1 = arith.constant 0 : i32
    return %c0_i32, %c0_i32_0 : i32, i32
  }
  func.func @transform_5(%arg0: i32, %arg1: i32, %arg2: i32) -> (i32, i32) {
    %c0_i32 = arith.constant 0 : i32
    %c0_i32_0 = arith.constant 0 : i32
    %c0_i32_1 = arith.constant 0 : i32
    return %c0_i32, %c0_i32_0 : i32, i32
  }
  func.func @transform_6(%arg0: i32, %arg1: i32, %arg2: i32) -> (i32, i32, i32, i32) {
    %c0_i32 = arith.constant 0 : i32
    %c0_i32_0 = arith.constant 0 : i32
    return %arg0, %c0_i32, %arg1, %arg2 : i32, i32, i32, i32
  }
}

</mosaic_0001>

<llo_original>
// kernel: tpu_custom_call.1
$region0: #{tpu_custom_call.1}
  #allocation0 [shape = 'u32[]', space=smem, size = 0x4, offset = 0x4, fixed_abs, tag = 'smem constant byte address 0x4 - core index']
  #allocation1 [shape = 'u32[72,128]{1,0:T(1,128)}', space=vmem, size = 0x9000, scoped, tag = 'internal scratch']
  %s0 = inlined_call_operand.hbm [shape: f32[2,8,32], index: 0, kind: input, shape index: {}]
  %s1 = inlined_call_operand.hbm [shape: f32[2,8,32], index: 1, kind: input, shape index: {}]
  %s2 = inlined_call_operand.hbm [shape: f32[4,32,32], index: 2, kind: input, shape index: {}]
  %s3 = inlined_call_operand.hbm [shape: f32[4,32], index: 3, kind: input, shape index: {}]
  %s4 = inlined_call_operand.hbm [shape: f32[4,32], index: 4, kind: input, shape index: {}]
  %s5 = inlined_call_operand.vmem [shape: f32[1,4], index: 5, kind: input, shape index: {}]
  %s6 = inlined_call_operand.hbm [shape: f32[2,4,8,8], index: 6, kind: output, shape index: {}]
  %s7 = sld [smem:[#allocation0]]
  $region77: #{tpu_custom_call.1} parent=0
    _
  %s9 = ssub.s32 1, %s7
  %s10 = scalar_select 0, %s9, %s7
  $region1: #{tpu_custom_call.1} parent=0
    #allocation2 [shape = 'u8[8192]{0}', space=vmem, size = 0x2000, scoped, tag = 'input window, operand 0']
    #allocation3 [shape = 's32[2]{0}', space=sflag, size = 0x8, scoped, tag = 'scoped memory for tpu_custom_call.1']
    #allocation4 [shape = 's32[2]{0}', space=sflag, size = 0x8, scoped, tag = 'scoped memory for tpu_custom_call.1']
    #allocation5 [shape = 'u8[8192]{0}', space=vmem, size = 0x2000, scoped, tag = 'input window, operand 1']
    #allocation6 [shape = 's32[2]{0}', space=sflag, size = 0x8, scoped, tag = 'scoped memory for tpu_custom_call.1']
    #allocation7 [shape = 'u8[65536]{0}', space=vmem, size = 0x10000, scoped, tag = 'input window, operand 2, single buffered']
    #allocation8 [shape = 'u8[2048]{0}', space=vmem, size = 0x800, scoped, tag = 'input window, operand 3, single buffered']
    #allocation9 [shape = 's32[1]{0}', space=sflag, size = 0x4, scoped, tag = 'scoped memory for tpu_custom_call.1']
    #allocation10 [shape = 'u8[2048]{0}', space=vmem, size = 0x800, scoped, tag = 'input window, operand 4, single buffered']
    #allocation11 [shape = 'u8[32768]{0}', space=vmem, size = 0x8000, scoped, tag = 'output window, operand 0']
    %11 = vsyncpa [#allocation3], 0
    %s12 = scalar_lea.sflag [#allocation3], 1
    %13 = vsyncpa %s12, 0
    %14 = vsyncpa [#allocation6], 0
    %s15 = scalar_lea.sflag [#allocation6], 1
    %16 = vsyncpa %s15, 0
    %17 = vsyncpa [#allocation9], 0
    %18 = vsyncpa [#allocation4], 0
    %s19 = scalar_lea.sflag [#allocation4], 1
    %20 = vsyncpa %s19, 0
    loop: start=0, step=1, limit=4
    $region2: #{tpu_custom_call.1} parent=1 // loop_pre_header
      _
    $region3: #{tpu_custom_call.1} parent=1 // loop_header
      %s22 = sphi 0, %s26
      %p23 = scmp.ge.s32.totalorder %s22, 4
      %s29 = sphi 0, %s48
      %s30 = sphi 0, %s44
      %s31 = sphi 0, %s40
      %s32 = sphi 0, %s29
      %s33 = sphi 0, %s30
      %s34 = sphi 0, %s31
      %s35 = sphi 0, %s32
      %s36 = sphi 0, %s33
      %s37 = sphi 0, %s34
      %s53 = sphi 0, %s55
      %s56 = sphi 0, %s53
      %s57 = sphi 0, %s56
      %s73 = sphi 0, %s57
      %s81 = sphi 0, %s83
      %s84 = sphi 0, %s81
      %s85 = sphi 0, %s84
      %s101 = sphi 0, %s85
      %s105 = sphi 0, %s105
      %s107 = sphi 0, %s105
      %s108 = sphi 0, %s107
      %s122 = sphi 0, %s108
      %s126 = sphi 0, %s126
      %s128 = sphi 0, %s126
      %s129 = sphi 0, %s128
      %s143 = sphi 0, %s129
      %s147 = sphi 0, %s147
      %s149 = sphi 0, %s147
      %s150 = sphi 0, %s149
      %s164 = sphi 0, %s150
      %s168 = sphi 0, %s168
      %s170 = sphi 0, %s168
      %s171 = sphi 0, %s170
      %s185 = sphi 0, %s171
      %s195 = sphi 0, %s197
      %s198 = sphi 0, %s195
      %s199 = sphi 0, %s198
      %s215 = sphi 0, %s199
    $region4: #{tpu_custom_call.1} parent=1 // loop_header_branch
      %25 = sbr.rel (%p23) target = $region8
    $region5: #{tpu_custom_call.1} parent=1 // loop_body
      %s27 = ssub.s32 %s22, 1
      %s28 = ssub.s32 %s22, 2
      %s38 = sadd.s32 1, %s31
      %p39 = scmp.ge.s32.totalorder %s38, 1
      %s40 = scalar_select %p39, 0, %s38
      %s41 = sadd.s32 1, %s30
      %s42 = scalar_select %p39, %s41, %s30
      %p43 = scmp.ge.s32.totalorder %s42, 1
      %s44 = scalar_select %p43, 0, %s42
      %s45 = sadd.s32 1, %s29
      %s46 = scalar_select %p43, %s45, %s29
      %p47 = scmp.ge.s32.totalorder %s46, 2
      %s48 = scalar_select %p47, 0, %s46
      %s49 = ssub.s32 %s29, %s48
      %s50 = ssub.s32 %s30, %s44
      %s51 = sor.u32 %s49, %s50
      %p52 = scmp.eq.s32.totalorder %s51, 0
      %s54 = sadd.s32 %s53, 1
      %s55 = scalar_select %p52, %s53, %s54
      %p58 = pneg %p52
      %p59 = scmp.eq.s32.totalorder %s22, 1
      %p60 = por %p58, %p59
      %p61 = scmp.ne.s32.totalorder %s53, %s56
      %p62 = scmp.eq.s32.totalorder %s22, 0
      %p63 = por %p61, %p62
      %p64 = scmp.ne.s32.totalorder %s53, %s56
      %p65 = scmp.eq.s32.totalorder %s27, 1
      %p66 = por %p64, %p65
      %p67 = scmp.ne.s32.totalorder %s56, %s57
      %p68 = scmp.eq.s32.totalorder %s27, 0
      %p69 = por %p67, %p68
      %p70 = scmp.ne.s32.totalorder %s56, %s57
      %p71 = scmp.eq.s32.totalorder %s28, 1
      %p72 = por %p70, %p71
      %p74 = scmp.ne.s32.totalorder %s57, %s73
      %p75 = scmp.eq.s32.totalorder %s28, 0
      %p76 = por %p74, %p75
      %s77 = ssub.s32 %s29, %s48
      %s78 = ssub.s32 %s31, %s40
      %s79 = sor.u32 %s77, %s78
      %p80 = scmp.eq.s32.totalorder %s79, 0
      %s82 = sadd.s32 %s81, 1
      %s83 = scalar_select %p80, %s81, %s82
      %p86 = pneg %p80
      %p87 = scmp.eq.s32.totalorder %s22, 1
      %p88 = por %p86, %p87
      %p89 = scmp.ne.s32.totalorder %s81, %s84
      %p90 = scmp.eq.s32.totalorder %s22, 0
      %p91 = por %p89, %p90
      %p92 = scmp.ne.s32.totalorder %s81, %s84
      %p93 = scmp.eq.s32.totalorder %s27, 1
      %p94 = por %p92, %p93
      %p95 = scmp.ne.s32.totalorder %s84, %s85
      %p96 = scmp.eq.s32.totalorder %s27, 0
      %p97 = por %p95, %p96
      %p98 = scmp.ne.s32.totalorder %s84, %s85
      %p99 = scmp.eq.s32.totalorder %s28, 1
      %p100 = por %p98, %p99
      %p102 = scmp.ne.s32.totalorder %s85, %s101
      %p103 = scmp.eq.s32.totalorder %s28, 0
      %p104 = por %p102, %p103
      %s106 = sadd.s32 %s105, 1
      %p109 = scmp.eq.s32.totalorder %s22, 1
      %p110 = scmp.ne.s32.totalorder %s105, %s107
      %p111 = scmp.eq.s32.totalorder %s22, 0
      %p112 = por %p110, %p111
      %p113 = scmp.ne.s32.totalorder %s105, %s107
      %p114 = scmp.eq.s32.totalorder %s27, 1
      %p115 = por %p113, %p114
      %p116 = scmp.ne.s32.totalorder %s107, %s108
      %p117 = scmp.eq.s32.totalorder %s27, 0
      %p118 = por %p116, %p117
      %p119 = scmp.ne.s32.totalorder %s107, %s108
      %p120 = scmp.eq.s32.totalorder %s28, 1
      %p121 = por %p119, %p120
      %p123 = scmp.ne.s32.totalorder %s108, %s122
      %p124 = scmp.eq.s32.totalorder %s28, 0
      %p125 = por %p123, %p124
      %s127 = sadd.s32 %s126, 1
      %p130 = scmp.eq.s32.totalorder %s22, 1
      %p131 = scmp.ne.s32.totalorder %s126, %s128
      %p132 = scmp.eq.s32.totalorder %s22, 0
      %p133 = por %p131, %p132
      %p134 = scmp.ne.s32.totalorder %s126, %s128
      %p135 = scmp.eq.s32.totalorder %s27, 1
      %p136 = por %p134, %p135
      %p137 = scmp.ne.s32.totalorder %s128, %s129
      %p138 = scmp.eq.s32.totalorder %s27, 0
      %p139 = por %p137, %p138
      %p140 = scmp.ne.s32.totalorder %s128, %s129
      %p141 = scmp.eq.s32.totalorder %s28, 1
      %p142 = por %p140, %p141
      %p144 = scmp.ne.s32.totalorder %s129, %s143
      %p145 = scmp.eq.s32.totalorder %s28, 0
      %p146 = por %p144, %p145
      %s148 = sadd.s32 %s147, 1
      %p151 = scmp.eq.s32.totalorder %s22, 1
      %p152 = scmp.ne.s32.totalorder %s147, %s149
      %p153 = scmp.eq.s32.totalorder %s22, 0
      %p154 = por %p152, %p153
      %p155 = scmp.ne.s32.totalorder %s147, %s149
      %p156 = scmp.eq.s32.totalorder %s27, 1
      %p157 = por %p155, %p156
      %p158 = scmp.ne.s32.totalorder %s149, %s150
      %p159 = scmp.eq.s32.totalorder %s27, 0
      %p160 = por %p158, %p159
      %p161 = scmp.ne.s32.totalorder %s149, %s150
      %p162 = scmp.eq.s32.totalorder %s28, 1
      %p163 = por %p161, %p162
      %p165 = scmp.ne.s32.totalorder %s150, %s164
      %p166 = scmp.eq.s32.totalorder %s28, 0
      %p167 = por %p165, %p166
      %s169 = sadd.s32 %s168, 1
      %p172 = scmp.eq.s32.totalorder %s22, 1
      %p173 = scmp.ne.s32.totalorder %s168, %s170
      %p174 = scmp.eq.s32.totalorder %s22, 0
      %p175 = por %p173, %p174
      %p176 = scmp.ne.s32.totalorder %s168, %s170
      %p177 = scmp.eq.s32.totalorder %s27, 1
      %p178 = por %p176, %p177
      %p179 = scmp.ne.s32.totalorder %s170, %s171
      %p180 = scmp.eq.s32.totalorder %s27, 0
      %p181 = por %p179, %p180
      %p182 = scmp.ne.s32.totalorder %s170, %s171
      %p183 = scmp.eq.s32.totalorder %s28, 1
      %p184 = por %p182, %p183
      %p186 = scmp.ne.s32.totalorder %s171, %s185
      %p187 = scmp.eq.s32.totalorder %s28, 0
      %p188 = por %p186, %p187
      %s189 = ssub.s32 %s29, %s48
      %s190 = ssub.s32 %s30, %s44
      %s191 = sor.u32 %s189, %s190
      %s192 = ssub.s32 %s31, %s40
      %s193 = sor.u32 %s191, %s192
      %p194 = scmp.eq.s32.totalorder %s193, 0
      %s196 = sadd.s32 %s195, 1
      %s197 = scalar_select %p194, %s195, %s196
      %p200 = pneg %p194
      %p201 = scmp.eq.s32.totalorder %s22, 1
      %p202 = por %p200, %p201
      %p203 = scmp.ne.s32.totalorder %s195, %s198
      %p204 = scmp.eq.s32.totalorder %s22, 0
      %p205 = por %p203, %p204
      %p206 = scmp.ne.s32.totalorder %s195, %s198
      %p207 = scmp.eq.s32.totalorder %s27, 1
      %p208 = por %p206, %p207
      %p209 = scmp.ne.s32.totalorder %s198, %s199
      %p210 = scmp.eq.s32.totalorder %s27, 0
      %p211 = por %p209, %p210
      %p212 = scmp.ne.s32.totalorder %s198, %s199
      %p213 = scmp.eq.s32.totalorder %s28, 1
      %p214 = por %p212, %p213
      %p216 = scmp.ne.s32.totalorder %s199, %s215
      %p217 = scmp.eq.s32.totalorder %s28, 0
      %p218 = por %p216, %p217
      %p219 = scmp.le.s32.totalorder 1, %s22
      %p220 = scmp.lt.s32.totalorder %s22, 3
      %p221 = pnand %p219, %p220
      %p222 = pneg %p221
      // Predicated region
      $region9: #{tpu_custom_call.1} parent=5 // pred_check
        _
      $region10: #{tpu_custom_call.1} parent=5 // pred_check_branch
        %224 = sbr.rel (%p221) target = $region12
      $region11: #{tpu_custom_call.1} parent=5 // pred_region
        %s225 = ssub.s32 %s22, 1
        // Predicated region
        $region13: #{tpu_custom_call.1} parent=11 // pred_check
          %p226 = pneg %p118
        $region14: #{tpu_custom_call.1} parent=11 // pred_check_branch
          %228 = sbr.rel (%p226) target = $region16
        $region15: #{tpu_custom_call.1} parent=11 // pred_region
          %230 = vsyncadd [#allocation6], 0
          %s231 = sshll.u32 %s2, 4
          %s232 = int_to_ptr.hbm [resolvable:$true] %s231
          %s233 = sshll.u32 [#allocation7], 4
          %s234 = int_to_ptr.vmem [resolvable:$true] %s233
          %239 = dma.hbm_to_vmem [thread:$0]  %s232, 2048, %s234, [#allocation6], 128, 128, 8
        $region16: #{tpu_custom_call.1} parent=11 // pred_fallthru
          _
        // Predicated region
        $region17: #{tpu_custom_call.1} parent=11 // pred_check
          %p240 = pneg %p139
        $region18: #{tpu_custom_call.1} parent=11 // pred_check_branch
          %242 = sbr.rel (%p240) target = $region20
        $region19: #{tpu_custom_call.1} parent=11 // pred_region
          %244 = vsyncadd [#allocation9], 0
          %s246 = sshll.u32 %s3, 4
          %s247 = int_to_ptr.hbm [resolvable:$true] %s246
          %s248 = sshll.u32 [#allocation8], 4
          %s249 = int_to_ptr.vmem [resolvable:$true] %s248
          %251 = dma.hbm_to_vmem [thread:$0]  %s247, 64, %s249, [#allocation9]
        $region20: #{tpu_custom_call.1} parent=11 // pred_fallthru
          _
        // Predicated region
        $region21: #{tpu_custom_call.1} parent=11 // pred_check
          %p252 = pneg %p160
        $region22: #{tpu_custom_call.1} parent=11 // pred_check_branch
          %254 = sbr.rel (%p252) target = $region24
        $region23: #{tpu_custom_call.1} parent=11 // pred_region
          %256 = vsyncadd [#allocation9], 0
          %s258 = sshll.u32 %s4, 4
          %s259 = int_to_ptr.hbm [resolvable:$true] %s258
          %s260 = sshll.u32 [#allocation10], 4
          %s261 = int_to_ptr.vmem [resolvable:$true] %s260
          %263 = dma.hbm_to_vmem [thread:$0]  %s259, 64, %s261, [#allocation9]
        $region24: #{tpu_custom_call.1} parent=11 // pred_fallthru
          _
        // Predicated region
        $region25: #{tpu_custom_call.1} parent=11 // pred_check
          %p264 = pneg %p181
        $region26: #{tpu_custom_call.1} parent=11 // pred_check_branch
          %266 = sbr.rel (%p264) target = $region28
        $region27: #{tpu_custom_call.1} parent=11 // pred_region
          _
        $region28: #{tpu_custom_call.1} parent=11 // pred_fallthru
          _
      $region12: #{tpu_custom_call.1} parent=5 // pred_fallthru
        _
      %p267 = scmp.lt.s32.totalorder %s22, 2
      // Predicated region
      $region29: #{tpu_custom_call.1} parent=5 // pred_check
        %p268 = pneg %p267
      $region30: #{tpu_custom_call.1} parent=5 // pred_check_branch
        %270 = sbr.rel (%p268) target = $region32
      $region31: #{tpu_custom_call.1} parent=5 // pred_region
        // Predicated region
        $region33: #{tpu_custom_call.1} parent=31 // pred_check
          %p271 = pneg %p63
        $region34: #{tpu_custom_call.1} parent=31 // pred_check_branch
          %273 = sbr.rel (%p271) target = $region36
        $region35: #{tpu_custom_call.1} parent=31 // pred_region
          %s274 = sand.u32 %s53, 1
          %s275 = scalar_lea.sflag [#allocation3], %s274
          %s276 = sand.u32 %s53, 1
          %s277 = smul.addr %s276, 8
          %s278 = scalar_lea.vmem [#allocation2], %s277
          %280 = vsyncadd %s275, 0
          %s281 = sadd.s32 %s30, %s29
          %s282 = smul.addr %s281, 8
          %s283 = scalar_lea.hbm %s0, %s282
          %s285 = sshll.u32 %s283, 4
          %s286 = int_to_ptr.hbm [resolvable:$true] %s285
          %s287 = sshll.u32 %s278, 4
          %s288 = int_to_ptr.vmem [resolvable:$true] %s287
          %290 = dma.hbm_to_vmem [thread:$0]  %s286, 128, %s288, %s275
        $region36: #{tpu_custom_call.1} parent=31 // pred_fallthru
          _
        // Predicated region
        $region37: #{tpu_custom_call.1} parent=31 // pred_check
          %p291 = pneg %p91
        $region38: #{tpu_custom_call.1} parent=31 // pred_check_branch
          %293 = sbr.rel (%p291) target = $region40
        $region39: #{tpu_custom_call.1} parent=31 // pred_region
          %s294 = sand.u32 %s22, 1
          %s295 = scalar_lea.sflag [#allocation6], %s294
          %s296 = sand.u32 %s81, 1
          %s297 = smul.addr %s296, 8
          %s298 = scalar_lea.vmem [#allocation5], %s297
          %300 = vsyncadd %s295, 0
          %s301 = sadd.s32 %s31, %s29
          %s302 = smul.addr %s301, 8
          %s303 = scalar_lea.hbm %s1, %s302
          %s305 = sshll.u32 %s303, 4
          %s306 = int_to_ptr.hbm [resolvable:$true] %s305
          %s307 = sshll.u32 %s298, 4
          %s308 = int_to_ptr.vmem [resolvable:$true] %s307
          %310 = dma.hbm_to_vmem [thread:$0]  %s306, 128, %s308, %s295
        $region40: #{tpu_custom_call.1} parent=31 // pred_fallthru
          _
      $region32: #{tpu_custom_call.1} parent=5 // pred_fallthru
        _
      %p311 = scmp.le.s32.totalorder 1, %s22
      %p312 = scmp.lt.s32.totalorder %s22, 3
      %p313 = pnand %p311, %p312
      %p314 = pneg %p313
      // Predicated region
      $region41: #{tpu_custom_call.1} parent=5 // pred_check
        _
      $region42: #{tpu_custom_call.1} parent=5 // pred_check_branch
        %316 = sbr.rel (%p313) target = $region44
      $region43: #{tpu_custom_call.1} parent=5 // pred_region
        %s317 = ssub.s32 %s22, 1
        %s318 = sand.u32 %s56, 1
        %s319 = scalar_lea.sflag [#allocation3], %s318
        %s320 = sand.u32 %s56, 1
        %s321 = smul.addr %s320, 8
        %s322 = scalar_lea.vmem [#allocation2], %s321
        // Predicated region
        $region45: #{tpu_custom_call.1} parent=43 // pred_check
          %p323 = pneg %p69
        $region46: #{tpu_custom_call.1} parent=43 // pred_check_branch
          %325 = sbr.rel (%p323) target = $region48
        $region47: #{tpu_custom_call.1} parent=43 // pred_region
          %327 = dma.done %s319, 128
        $region48: #{tpu_custom_call.1} parent=43 // pred_fallthru
          _
        %s328 = sand.u32 %s27, 1
        %s329 = scalar_lea.sflag [#allocation6], %s328
        %s330 = sand.u32 %s84, 1
        %s331 = smul.addr %s330, 8
        %s332 = scalar_lea.vmem [#allocation5], %s331
        // Predicated region
        $region49: #{tpu_custom_call.1} parent=43 // pred_check
          %p333 = pneg %p97
        $region50: #{tpu_custom_call.1} parent=43 // pred_check_branch
          %335 = sbr.rel (%p333) target = $region52
        $region51: #{tpu_custom_call.1} parent=43 // pred_region
          %337 = dma.done %s329, 128
        $region52: #{tpu_custom_call.1} parent=43 // pred_fallthru
          _
        // Predicated region
        $region53: #{tpu_custom_call.1} parent=43 // pred_check
          %p338 = pneg %p118
        $region54: #{tpu_custom_call.1} parent=43 // pred_check_branch
          %340 = sbr.rel (%p338) target = $region56
        $region55: #{tpu_custom_call.1} parent=43 // pred_region
          %342 = dma.done [#allocation6], 2048
        $region56: #{tpu_custom_call.1} parent=43 // pred_fallthru
          _
        // Predicated region
        $region57: #{tpu_custom_call.1} parent=43 // pred_check
          %p343 = pneg %p139
        $region58: #{tpu_custom_call.1} parent=43 // pred_check_branch
          %345 = sbr.rel (%p343) target = $region60
        $region59: #{tpu_custom_call.1} parent=43 // pred_region
          %347 = dma.done [#allocation9], 64
        $region60: #{tpu_custom_call.1} parent=43 // pred_fallthru
          _
        // Predicated region
        $region61: #{tpu_custom_call.1} parent=43 // pred_check
          %p348 = pneg %p160
        $region62: #{tpu_custom_call.1} parent=43 // pred_check_branch
          %350 = sbr.rel (%p348) target = $region64
        $region63: #{tpu_custom_call.1} parent=43 // pred_region
          %352 = dma.done [#allocation9], 64
        $region64: #{tpu_custom_call.1} parent=43 // pred_fallthru
          _
        %s353 = sand.u32 %s56, 1
        %s354 = scalar_lea.sflag [#allocation3], %s353
        %s355 = sand.u32 %s56, 1
        %s356 = smul.addr %s355, 8
        %s357 = scalar_lea.vmem [#allocation2], %s356
        %p358 = pneg %p69
        %p359 = pneg %p66
        %s360 = sand.u32 %s27, 1
        %s361 = scalar_lea.sflag [#allocation6], %s360
        %s362 = sand.u32 %s84, 1
        %s363 = smul.addr %s362, 8
        %s364 = scalar_lea.vmem [#allocation5], %s363
        %p365 = pneg %p97
        %p366 = pneg %p94
        %p367 = pneg %p118
        %p368 = pneg %p115
        %p369 = pneg %p139
        %p370 = pneg %p136
        %p371 = pneg %p160
        %p372 = pneg %p157
        %p373 = pneg %p181
        %p374 = pneg %p178
        %p375 = pneg %p211
        %p376 = pneg %p208
        %s377 = sand.u32 %s198, 1
        %s378 = scalar_lea.sflag [#allocation4], %s377
        %s379 = sand.u32 %s198, 1
        %s380 = smul.addr %s379, 32
        %s381 = scalar_lea.vmem [#allocation11], %s380
        %v382 = vld [vmem:[%s322] sm:$0xff]
        %v383 = vld [vmem:[%s332] sm:$0xff]
        %v384 = vld [vmem:[#allocation8] sm:$0xf]
        %v385 = vld [vmem:[#allocation10] sm:$0xf]
        %v386 = vld [vmem:[%s5] sm:$0x1]
        %v388 = vperm.slane %v386, 0
        %vm390 = vcmask 261120
        %v392 = vsel %vm390, %v382, 0
        %v395 = vsel %vm390, %v385, 0
        %397 = vmatpush.xpose.msra.mxu0 0.0
        %398 = vmatpush.xpose.msra.mxu0 0.0
        %399 = vmatpush.xpose.msra.mxu0 0.0
        %400 = vmatpush.xpose.msra.mxu0 0.0
        %401 = vmatpush.xpose.msra.mxu0 0.0
        %402 = vmatpush.xpose.msra.mxu0 0.0
        %403 = vmatpush.xpose.msra.mxu0 0.0
        %404 = vmatpush.xpose.msra.mxu0 0.0
        %405 = vmatpush.xpose.msra.mxu0 0.0
        %406 = vmatpush.xpose.msra.mxu0 0.0
        %407 = vmatpush.xpose.msra.mxu0 0.0
        %408 = vmatpush.xpose.msra.mxu0 0.0
        %409 = vmatpush.xpose.msra.mxu0 0.0
        %410 = vmatpush.xpose.msra.mxu0 0.0
        %411 = vmatpush.xpose.msra.mxu0 0.0
        %412 = vmatpush.xpose.msra.mxu0 %v395
        %413 = vmatmul.f32.gmra.mxu0 %v392
        %v414 = vpop.f32.mrf.mxu0
        %v415 = vadd.f32 %v388, %v414
        %416 = vdwg.mxu0
        %v417 = vld [vmem:[#allocation7] sm:$0xff]
        %v418 = vld [vmem:[#allocation7 + $0x8] sm:$0xff]
        %v419 = vld [vmem:[#allocation7 + $0x10] sm:$0xff]
        %v420 = vld [vmem:[#allocation7 + $0x18] sm:$0xff]
        %v421 = vperm.slane %v384, 0
        %v423 = vsel %vm390, %v417, 0
        %v426 = vsel %vm390, %v418, 0
        %v429 = vsel %vm390, %v419, 0
        %v432 = vsel %vm390, %v420, 0
        %434 = vmatpush.xpose.msra.mxu0 0.0
        %435 = vmatpush.xpose.msra.mxu0 0.0
        %436 = vmatpush.xpose.msra.mxu0 0.0
        %437 = vmatpush.xpose.msra.mxu0 0.0
        %438 = vmatpush.xpose.msra.mxu0 0.0
        %439 = vmatpush.xpose.msra.mxu0 0.0
        %440 = vmatpush.xpose.msra.mxu0 0.0
        %441 = vmatpush.xpose.msra.mxu0 0.0
        %442 = vmatpush.xpose.msra.mxu0 0.0
        %443 = vmatpush.xpose.msra.mxu0 0.0
        %444 = vmatpush.xpose.msra.mxu0 0.0
        %445 = vmatpush.xpose.msra.mxu0 0.0
        %446 = vmatpush.xpose.msra.mxu0 %v432
        %447 = vmatpush.xpose.msra.mxu0 %v429
        %448 = vmatpush.xpose.msra.mxu0 %v426
        %449 = vmatpush.xpose.msra.mxu0 %v423
        %450 = vmatmul.f32.gmra.mxu0 %v392
        %v451 = vpop.f32.mrf.mxu0
        %v452 = vadd.f32 %v421, %v451
        %453 = vdwg.mxu0
        %455 = vset.pattern.permute.xlu0 0
        %456 = vperm.xlu0 %455, %v415
        %v457 = vpop.permute.xlu0 %456
        %v460 = vsel %vm390, %v452, 0
        %v463 = vsel %vm390, %v383, 0
        %465 = vmatpush.xpose.msra.mxu0 0.0
        %466 = vmatpush.xpose.msra.mxu0 0.0
        %467 = vmatpush.xpose.msra.mxu0 0.0
        %468 = vmatpush.xpose.msra.mxu0 0.0
        %469 = vmatpush.xpose.msra.mxu0 0.0
        %470 = vmatpush.xpose.msra.mxu0 0.0
        %471 = vmatpush.xpose.msra.mxu0 0.0
        %472 = vmatpush.xpose.msra.mxu0 0.0
        %473 = vmatpush.xpose.msra.mxu0 0.0
        %474 = vmatpush.xpose.msra.mxu0 0.0
        %475 = vmatpush.xpose.msra.mxu0 0.0
        %476 = vmatpush.xpose.msra.mxu0 0.0
        %477 = vmatpush.xpose.msra.mxu0 0.0
        %478 = vmatpush.xpose.msra.mxu0 0.0
        %479 = vmatpush.xpose.msra.mxu0 0.0
        %480 = vmatpush.xpose.msra.mxu0 %v463
        %481 = vmatmul.f32.gmra.mxu0 %v460
        %v482 = vpop.f32.mrf.mxu0
        %v483 = vadd.f32 %v457, %v482
        %484 = vdwg.mxu0
        %vm485 = vcmask 64512
        %486 = vst.msk [vmem:[%s381] sm:$0xff] %vm485, %v483
        %s487 = scalar_lea.vmem [#allocation7], 32
        %v488 = vld [vmem:[%s487] sm:$0xff]
        %v489 = vld [vmem:[%s487 + $0x8] sm:$0xff]
        %v490 = vld [vmem:[%s487 + $0x10] sm:$0xff]
        %v491 = vld [vmem:[%s487 + $0x18] sm:$0xff]
        %v492 = vperm.slane %v384, 1
        %v494 = vsel %vm390, %v488, 0
        %v497 = vsel %vm390, %v489, 0
        %v500 = vsel %vm390, %v490, 0
        %v503 = vsel %vm390, %v491, 0
        %505 = vmatpush.xpose.msra.mxu0 0.0
        %506 = vmatpush.xpose.msra.mxu0 0.0
        %507 = vmatpush.xpose.msra.mxu0 0.0
        %508 = vmatpush.xpose.msra.mxu0 0.0
        %509 = vmatpush.xpose.msra.mxu0 0.0
        %510 = vmatpush.xpose.msra.mxu0 0.0
        %511 = vmatpush.xpose.msra.mxu0 0.0
        %512 = vmatpush.xpose.msra.mxu0 0.0
        %513 = vmatpush.xpose.msra.mxu0 0.0
        %514 = vmatpush.xpose.msra.mxu0 0.0
        %515 = vmatpush.xpose.msra.mxu0 0.0
        %516 = vmatpush.xpose.msra.mxu0 0.0
        %517 = vmatpush.xpose.msra.mxu0 %v503
        %518 = vmatpush.xpose.msra.mxu0 %v500
        %519 = vmatpush.xpose.msra.mxu0 %v497
        %520 = vmatpush.xpose.msra.mxu0 %v494
        %521 = vmatmul.f32.gmra.mxu0 %v392
        %v522 = vpop.f32.mrf.mxu0
        %v523 = vadd.f32 %v492, %v522
        %524 = vdwg.mxu0
        %525 = vset.pattern.permute.xlu0 1
        %526 = vperm.xlu0 %525, %v415
        %v527 = vpop.permute.xlu0 %526
        %v530 = vsel %vm390, %v523, 0
        %532 = vmatpush.xpose.msra.mxu0 0.0
        %533 = vmatpush.xpose.msra.mxu0 0.0
        %534 = vmatpush.xpose.msra.mxu0 0.0
        %535 = vmatpush.xpose.msra.mxu0 0.0
        %536 = vmatpush.xpose.msra.mxu0 0.0
        %537 = vmatpush.xpose.msra.mxu0 0.0
        %538 = vmatpush.xpose.msra.mxu0 0.0
        %539 = vmatpush.xpose.msra.mxu0 0.0
        %540 = vmatpush.xpose.msra.mxu0 0.0
        %541 = vmatpush.xpose.msra.mxu0 0.0
        %542 = vmatpush.xpose.msra.mxu0 0.0
        %543 = vmatpush.xpose.msra.mxu0 0.0
        %544 = vmatpush.xpose.msra.mxu0 0.0
        %545 = vmatpush.xpose.msra.mxu0 0.0
        %546 = vmatpush.xpose.msra.mxu0 0.0
        %547 = vmatpush.xpose.msra.mxu0 %v463
        %548 = vmatmul.f32.gmra.mxu0 %v530
        %v549 = vpop.f32.mrf.mxu0
        %v550 = vadd.f32 %v527, %v549
        %551 = vdwg.mxu0
        %s552 = scalar_lea.vmem %s381, 8 [#allocation11]
        %553 = vst.msk [vmem:[%s552] sm:$0xff] %vm485, %v550
        %s554 = scalar_lea.vmem [#allocation7], 64
        %v555 = vld [vmem:[%s554] sm:$0xff]
        %v556 = vld [vmem:[%s554 + $0x8] sm:$0xff]
        %v557 = vld [vmem:[%s554 + $0x10] sm:$0xff]
        %v558 = vld [vmem:[%s554 + $0x18] sm:$0xff]
        %v559 = vperm.slane %v384, 2
        %v561 = vsel %vm390, %v555, 0
        %v564 = vsel %vm390, %v556, 0
        %v567 = vsel %vm390, %v557, 0
        %v570 = vsel %vm390, %v558, 0
        %572 = vmatpush.xpose.msra.mxu0 0.0
        %573 = vmatpush.xpose.msra.mxu0 0.0
        %574 = vmatpush.xpose.msra.mxu0 0.0
        %575 = vmatpush.xpose.msra.mxu0 0.0
        %576 = vmatpush.xpose.msra.mxu0 0.0
        %577 = vmatpush.xpose.msra.mxu0 0.0
        %578 = vmatpush.xpose.msra.mxu0 0.0
        %579 = vmatpush.xpose.msra.mxu0 0.0
        %580 = vmatpush.xpose.msra.mxu0 0.0
        %581 = vmatpush.xpose.msra.mxu0 0.0
        %582 = vmatpush.xpose.msra.mxu0 0.0
        %583 = vmatpush.xpose.msra.mxu0 0.0
        %584 = vmatpush.xpose.msra.mxu0 %v570
        %585 = vmatpush.xpose.msra.mxu0 %v567
        %586 = vmatpush.xpose.msra.mxu0 %v564
        %587 = vmatpush.xpose.msra.mxu0 %v561
        %588 = vmatmul.f32.gmra.mxu0 %v392
        %v589 = vpop.f32.mrf.mxu0
        %v590 = vadd.f32 %v559, %v589
        %591 = vdwg.mxu0
        %592 = vset.pattern.permute.xlu0 2
        %593 = vperm.xlu0 %592, %v415
        %v594 = vpop.permute.xlu0 %593
        %v597 = vsel %vm390, %v590, 0
        %599 = vmatpush.xpose.msra.mxu0 0.0
        %600 = vmatpush.xpose.msra.mxu0 0.0
        %601 = vmatpush.xpose.msra.mxu0 0.0
        %602 = vmatpush.xpose.msra.mxu0 0.0
        %603 = vmatpush.xpose.msra.mxu0 0.0
        %604 = vmatpush.xpose.msra.mxu0 0.0
        %605 = vmatpush.xpose.msra.mxu0 0.0
        %606 = vmatpush.xpose.msra.mxu0 0.0
        %607 = vmatpush.xpose.msra.mxu0 0.0
        %608 = vmatpush.xpose.msra.mxu0 0.0
        %609 = vmatpush.xpose.msra.mxu0 0.0
        %610 = vmatpush.xpose.msra.mxu0 0.0
        %611 = vmatpush.xpose.msra.mxu0 0.0
        %612 = vmatpush.xpose.msra.mxu0 0.0
        %613 = vmatpush.xpose.msra.mxu0 0.0
        %614 = vmatpush.xpose.msra.mxu0 %v463
        %615 = vmatmul.f32.gmra.mxu0 %v597
        %v616 = vpop.f32.mrf.mxu0
        %v617 = vadd.f32 %v594, %v616
        %618 = vdwg.mxu0
        %s619 = scalar_lea.vmem %s381, 16 [#allocation11]
        %620 = vst.msk [vmem:[%s619] sm:$0xff] %vm485, %v617
        %s621 = scalar_lea.vmem [#allocation7], 96
        %v622 = vld [vmem:[%s621] sm:$0xff]
        %v623 = vld [vmem:[%s621 + $0x8] sm:$0xff]
        %v624 = vld [vmem:[%s621 + $0x10] sm:$0xff]
        %v625 = vld [vmem:[%s621 + $0x18] sm:$0xff]
        %v626 = vperm.slane %v384, 3
        %v628 = vsel %vm390, %v622, 0
        %v631 = vsel %vm390, %v623, 0
        %v634 = vsel %vm390, %v624, 0
        %v637 = vsel %vm390, %v625, 0
        %639 = vmatpush.xpose.msra.mxu0 0.0
        %640 = vmatpush.xpose.msra.mxu0 0.0
        %641 = vmatpush.xpose.msra.mxu0 0.0
        %642 = vmatpush.xpose.msra.mxu0 0.0
        %643 = vmatpush.xpose.msra.mxu0 0.0
        %644 = vmatpush.xpose.msra.mxu0 0.0
        %645 = vmatpush.xpose.msra.mxu0 0.0
        %646 = vmatpush.xpose.msra.mxu0 0.0
        %647 = vmatpush.xpose.msra.mxu0 0.0
        %648 = vmatpush.xpose.msra.mxu0 0.0
        %649 = vmatpush.xpose.msra.mxu0 0.0
        %650 = vmatpush.xpose.msra.mxu0 0.0
        %651 = vmatpush.xpose.msra.mxu0 %v637
        %652 = vmatpush.xpose.msra.mxu0 %v634
        %653 = vmatpush.xpose.msra.mxu0 %v631
        %654 = vmatpush.xpose.msra.mxu0 %v628
        %655 = vmatmul.f32.gmra.mxu0 %v392
        %v656 = vpop.f32.mrf.mxu0
        %v657 = vadd.f32 %v626, %v656
        %658 = vdwg.mxu0
        %659 = vset.pattern.permute.xlu0 3
        %660 = vperm.xlu0 %659, %v415
        %v661 = vpop.permute.xlu0 %660
        %v664 = vsel %vm390, %v657, 0
        %666 = vmatpush.xpose.msra.mxu0 0.0
        %667 = vmatpush.xpose.msra.mxu0 0.0
        %668 = vmatpush.xpose.msra.mxu0 0.0
        %669 = vmatpush.xpose.msra.mxu0 0.0
        %670 = vmatpush.xpose.msra.mxu0 0.0
        %671 = vmatpush.xpose.msra.mxu0 0.0
        %672 = vmatpush.xpose.msra.mxu0 0.0
        %673 = vmatpush.xpose.msra.mxu0 0.0
        %674 = vmatpush.xpose.msra.mxu0 0.0
        %675 = vmatpush.xpose.msra.mxu0 0.0
        %676 = vmatpush.xpose.msra.mxu0 0.0
        %677 = vmatpush.xpose.msra.mxu0 0.0
        %678 = vmatpush.xpose.msra.mxu0 0.0
        %679 = vmatpush.xpose.msra.mxu0 0.0
        %680 = vmatpush.xpose.msra.mxu0 0.0
        %681 = vmatpush.xpose.msra.mxu0 %v463
        %682 = vmatmul.f32.gmra.mxu0 %v664
        %v683 = vpop.f32.mrf.mxu0
        %v684 = vadd.f32 %v661, %v683
        %685 = vdwg.mxu0
        %s686 = scalar_lea.vmem %s381, 24 [#allocation11]
        %687 = vst.msk [vmem:[%s686] sm:$0xff] %vm485, %v684
        %s688 = sand.u32 %s198, 1
        %s689 = scalar_lea.sflag [#allocation4], %s688
        %s690 = sand.u32 %s198, 1
        %s691 = smul.addr %s690, 32
        %s692 = scalar_lea.vmem [#allocation11], %s691
        // Predicated region
        $region65: #{tpu_custom_call.1} parent=43 // pred_check
          %p693 = pneg %p208
        $region66: #{tpu_custom_call.1} parent=43 // pred_check_branch
          %695 = sbr.rel (%p693) target = $region68
        $region67: #{tpu_custom_call.1} parent=43 // pred_region
          %697 = vsyncadd %s689, 0
          %s698 = sadd.s32 %s34, %s33
          %s699 = smul.addr %s32, 4
          %s700 = sadd.s32 %s698, %s699
          %s701 = smul.addr %s700, 8
          %s702 = scalar_lea.hbm %s6, %s701
          %s703 = sshll.u32 %s692, 4
          %s704 = int_to_ptr.vmem [resolvable:$true] %s703
          %s705 = sshll.u32 %s702, 4
          %s706 = int_to_ptr.hbm [resolvable:$true] %s705
          %711 = dma.vmem_to_hbm [thread:$0]  %s704, 512, %s706, %s689, 128, 128, 8
        $region68: #{tpu_custom_call.1} parent=43 // pred_fallthru
          _
      $region44: #{tpu_custom_call.1} parent=5 // pred_fallthru
        _
      %p712 = scmp.le.s32.totalorder 2, %s22
      // Predicated region
      $region69: #{tpu_custom_call.1} parent=5 // pred_check
        %p713 = pneg %p712
      $region70: #{tpu_custom_call.1} parent=5 // pred_check_branch
        %715 = sbr.rel (%p713) target = $region72
      $region71: #{tpu_custom_call.1} parent=5 // pred_region
        %s716 = ssub.s32 %s22, 2
        // Predicated region
        $region73: #{tpu_custom_call.1} parent=71 // pred_check
          %p717 = pneg %p214
        $region74: #{tpu_custom_call.1} parent=71 // pred_check_branch
          %719 = sbr.rel (%p717) target = $region76
        $region75: #{tpu_custom_call.1} parent=71 // pred_region
          %s720 = sand.u32 %s199, 1
          %s721 = scalar_lea.sflag [#allocation4], %s720
          %s722 = sand.u32 %s199, 1
          %s723 = smul.addr %s722, 32
          %s724 = scalar_lea.vmem [#allocation11], %s723
          %726 = dma.done %s721, 512
        $region76: #{tpu_custom_call.1} parent=71 // pred_fallthru
          _
      $region72: #{tpu_custom_call.1} parent=5 // pred_fallthru
        _
    $region6: #{tpu_custom_call.1} parent=1 // loop_footer
      %s26 = sadd.s32 1, %s22
    $region7: #{tpu_custom_call.1} parent=1 // loop_footer_branch
      %21 = sbr.rel target = $region3
    $region8: #{tpu_custom_call.1} parent=1 // loop_exit
      _
    %727 = vsyncpa [#allocation3], 1
    %s728 = scalar_lea.sflag [#allocation3], 1
    %729 = vsyncpa %s728, 1
    %730 = vsyncpa [#allocation6], 1
    %s731 = scalar_lea.sflag [#allocation6], 1
    %732 = vsyncpa %s731, 1
    %733 = vsyncpa [#allocation9], 1
    %734 = vsyncpa [#allocation4], 1
    %s735 = scalar_lea.sflag [#allocation4], 1
    %736 = vsyncpa %s735, 1

</llo_original>
